<compile_context>
chip_gen: v7x
topology: tpu7x:2x2x1
jax: 0.10.0
libtpu: 0.0.40
codegen_flags: <defaults>
</compile_context>

<pallas_src>
import functools
import math

import jax
import jax.numpy as jnp
from jax.experimental import pallas as pl
from jax.experimental.pallas import tpu as pltpu


def _choose_tile(n, preferred):
    """Largest tile t <= preferred with n % t == 0 and (t == n or t % 8 == 0)."""
    if n <= preferred:
        return n
    for t in range(preferred, 7, -1):
        if n % t == 0 and t % 8 == 0:
            return t
    return n  # fall back to a single full-size tile


def _device_defaults():
    """(q_tile, kv_tile, vmem_limit_bytes) tuned per TPU generation."""
    try:
        kind = jax.devices()[0].device_kind.lower()
    except Exception:  # pragma: no cover - defensive
        kind = ""
    if "v5 lite" in kind or "v5e" in kind or "v5lite" in kind:
        # v5e: 4x128^2 MXU already filled at tk=128; spend VMEM on a taller
        # q tile instead (fewer K/V re-streams over the lowest-BW HBM).
        return 256, 128, 100 * 1024 * 1024
    if "v6" in kind:
        # v6e: 2x256^2 MXU -> tk=256 fills the array; 128 MiB VMEM headroom.
        return 128, 256, 96 * 1024 * 1024
    if "7" in kind:
        # v7x: same MXU-fill win as v6e, but only 64 MiB physical VMEM.
        return 128, 256, 48 * 1024 * 1024
    return 128, 128, 48 * 1024 * 1024


def _merge_heads(x3d, num_heads):
    # (H, T, d_k) -> (T, H*d_k): lane concat, executed once per q tile.
    return jnp.concatenate([x3d[h] for h in range(num_heads)], axis=-1)


# --------------------------- stage 1: QKV projection ---------------------------
def _qkv_proj_kernel(x_ref, wqkv_ref, q_ref, k_ref, v_ref, *,
                     num_heads, d_k, compute_dtype):
    D = num_heads * d_k
    x = x_ref[0].astype(compute_dtype)               # (ts, D)
    w = wqkv_ref[...]                                # (3D, D), q rows pre-scaled
    # x @ W_QKV.T -- one fused MXU pass with N = 3D, f32 accumulation.
    qkv = jax.lax.dot_general(
        x, w, (((1,), (1,)), ((), ())),
        preferred_element_type=jnp.float32)          # (ts, 3D)
    # Head-major relayout happens here, once per token (not per kv step).
    for h in range(num_heads):
        q_ref[0, h] = qkv[:, 0 * D + h * d_k:0 * D + (h + 1) * d_k].astype(q_ref.dtype)
        k_ref[0, h] = qkv[:, 1 * D + h * d_k:1 * D + (h + 1) * d_k].astype(k_ref.dtype)
        v_ref[0, h] = qkv[:, 2 * D + h * d_k:2 * D + (h + 1) * d_k].astype(v_ref.dtype)


# ---------------- stage 2: flash attention + output projection ----------------
def _flash_attn_kernel(q_ref, k_ref, v_ref, wo_ref, o_ref,
                       acc_ref, m_ref, l_ref, *, compute_dtype):
    _, H, tq, d_k = q_ref.shape
    tk = k_ref.shape[2]

    qi = pl.program_id(1)
    ki = pl.program_id(2)
    q_lo = qi * tq
    q_hi = q_lo + tq - 1            # last query row covered by this q tile
    k_lo = ki * tk

    bf16_exp = jnp.dtype(compute_dtype) == jnp.dtype(jnp.bfloat16)

    # Skip kv blocks that lie entirely in the causal future of this q tile
    # (their DMAs are also elided by the clamped K/V index_map in the wrapper).
    @pl.when(k_lo <= q_hi)
    def _():
        @pl.when(ki == 0)
        def _():
            m_ref[...] = jnp.full(m_ref.shape, -jnp.inf, dtype=m_ref.dtype)
            l_ref[...] = jnp.zeros(l_ref.shape, dtype=l_ref.dtype)
            acc_ref[...] = jnp.zeros(acc_ref.shape, dtype=acc_ref.dtype)

        q_hm = q_ref[0]                                        # (H, tq, d_k), pre-scaled
        k_hm = k_ref[0]                                        # (H, tk, d_k)
        v_hm = v_ref[0]                                        # (H, tk, d_k)

        # q is already scaled by 1/sqrt(d_k); one batched MXU pass over all heads.
        s = jnp.einsum('hqd,hkd->hqk', q_hm, k_hm,
                       preferred_element_type=jnp.float32)     # (H, tq, tk) f32

        def online_update(s_blk):
            m_prev = m_ref[...]                                # (H, tq, 1)
            m_new = jnp.maximum(m_prev, jnp.max(s_blk, axis=-1, keepdims=True))
            alpha = jnp.exp(m_prev - m_new)
            if bf16_exp:
                # bf16 EUP exp (v6e/v7x); values are range-bounded after the
                # max subtraction. Stats stay f32.
                p = jnp.exp((s_blk - m_new).astype(jnp.bfloat16))
                p_sum = jnp.sum(p.astype(jnp.float32), axis=-1, keepdims=True)
            else:
                p = jnp.exp(s_blk - m_new)
                p_sum = jnp.sum(p, axis=-1, keepdims=True)
            l_ref[...] = alpha * l_ref[...] + p_sum
            acc_ref[...] = alpha * acc_ref[...] + jnp.einsum(
                'hqk,hkd->hqd', p.astype(compute_dtype), v_hm,
                preferred_element_type=jnp.float32)
            m_ref[...] = m_new

        # Only diagonal-crossing blocks pay for the causal mask.
        diag = (k_lo + tk - 1) > q_lo

        @pl.when(diag)
        def _():
            rows = q_lo + jax.lax.broadcasted_iota(jnp.int32, (1, tq, tk), 1)
            cols = k_lo + jax.lax.broadcasted_iota(jnp.int32, (1, tq, tk), 2)
            # -inf is safe here: kv block 0 is never skipped and its column 0
            # is always causally visible, so every row's running max is finite
            # from the first processed block onward (no exp(-inf - (-inf))).
            online_update(jnp.where(rows >= cols, s, -jnp.inf))

        @pl.when(jnp.logical_not(diag))
        def _():
            online_update(s)

    # Finalize on the kv block containing this tile's causal diagonal
    # (later kv blocks are skipped, so this is the last block that runs).
    @pl.when(ki == q_hi // tk)
    def _():
        l = l_ref[...]
        r = pl.reciprocal(l, approx=True)              # EUP slot
        inv_l = r * (2.0 - l * r)                      # one Newton step -> ~f32 exact
        y = _merge_heads(acc_ref[...] * inv_l, H)      # (tq, D), lane-dense
        out = jax.lax.dot_general(                     # y @ W_O.T
            y.astype(compute_dtype), wo_ref[...],
            (((1,), (1,)), ((), ())),
            preferred_element_type=jnp.float32)        # (tq, D)
        o_ref[0] = out.astype(o_ref.dtype)


# ---------------------------------- wrapper -----------------------------------
def multi_head_self_attention(x, w_qkv, w_o, num_heads, *,
                              compute_dtype=None,
                              q_tile=None, kv_tile=None, seq_tile=256):
    """Causal MHA forward. x: (B, S, D); w_qkv: (3D, D); w_o: (D, D)."""
    B, S, D = x.shape
    d_k = D // num_heads
    if compute_dtype is None:
        compute_dtype = x.dtype
    compute_dtype = jnp.dtype(compute_dtype)
    itemsize = compute_dtype.itemsize

    dq, dkv, vmem_limit = _device_defaults()
    if q_tile is None:
        q_tile = dq
    if kv_tile is None:
        kv_tile = dkv

    # One-time weight prep: fold 1/sqrt(d_k) into the Q rows of W_QKV (in f32,
    # before any precision loss) and cast both weights to the compute dtype.
    scale = 1.0 / math.sqrt(d_k)
    w_qkv_c = jnp.concatenate([w_qkv[:D] * scale, w_qkv[D:]], axis=0).astype(compute_dtype)
    w_o_c = w_o.astype(compute_dtype)

    # ---------------- stage 1: fused QKV projection (head-major out) ----------
    ts = _choose_tile(S, seq_tile)
    proj_kernel = functools.partial(
        _qkv_proj_kernel, num_heads=num_heads, d_k=d_k, compute_dtype=compute_dtype)
    q, k, v = pl.pallas_call(
        proj_kernel,
        out_shape=[jax.ShapeDtypeStruct((B, num_heads, S, d_k), compute_dtype)] * 3,
        grid=(B, S // ts),
        in_specs=[
            pl.BlockSpec((1, ts, D), lambda b, si: (b, si, 0)),
            pl.BlockSpec((3 * D, D), lambda b, si: (0, 0)),
        ],
        out_specs=[pl.BlockSpec((1, num_heads, ts, d_k),
                                lambda b, si: (b, 0, si, 0))] * 3,
        compiler_params=pltpu.CompilerParams(
            dimension_semantics=("parallel", "parallel"),
            vmem_limit_bytes=vmem_limit),
        cost_estimate=pl.CostEstimate(
            flops=int(2 * B * S * D * 3 * D),
            transcendentals=0,
            bytes_accessed=int(B * S * D * jnp.dtype(x.dtype).itemsize
                               + 3 * D * D * itemsize
                               + 3 * B * S * D * itemsize)),
    )(x, w_qkv_c)

    # -------- stage 2: flash attention + fused output projection --------------
    tq = _choose_tile(S, q_tile)
    tk = _choose_tile(S, kv_tile)

    def q_map(b, qi, ki):
        return (b, 0, qi, 0)

    def kv_map(b, qi, ki):
        # Clamp to the causal-diagonal block: kv blocks in the causal future
        # resolve to an already-resident block index, so no DMA is issued.
        return (b, 0, jnp.minimum(ki, (qi * tq + tq - 1) // tk), 0)

    def wo_map(b, qi, ki):
        return (0, 0)

    def out_map(b, qi, ki):
        return (b, qi, 0)

    attn_kernel = functools.partial(_flash_attn_kernel, compute_dtype=compute_dtype)
    out = pl.pallas_call(
        attn_kernel,
        out_shape=jax.ShapeDtypeStruct((B, S, D), x.dtype),
        grid=(B, S // tq, S // tk),
        in_specs=[
            pl.BlockSpec((1, num_heads, tq, d_k), q_map),
            pl.BlockSpec((1, num_heads, tk, d_k), kv_map),
            pl.BlockSpec((1, num_heads, tk, d_k), kv_map),
            pl.BlockSpec((D, D), wo_map),
        ],
        out_specs=pl.BlockSpec((1, tq, D), out_map),
        scratch_shapes=[
            pltpu.VMEM((num_heads, tq, d_k), jnp.float32),    # unnormalized acc
            pltpu.VMEM((num_heads, tq, 1), jnp.float32),      # running max m
            pltpu.VMEM((num_heads, tq, 1), jnp.float32),      # running sum l
        ],
        compiler_params=pltpu.CompilerParams(
            dimension_semantics=("parallel", "parallel", "arbitrary"),
            vmem_limit_bytes=vmem_limit),
        cost_estimate=pl.CostEstimate(
            # causal: ~half the full S^2 attention work + the W_O projection
            flops=int(2 * B * S * S * D + 2 * B * S * D * D),
            transcendentals=int(B * num_heads * S * S // 2),
            bytes_accessed=int(3 * B * S * D * itemsize        # q/k/v reads
                               + D * D * itemsize              # W_O
                               + B * S * D * jnp.dtype(x.dtype).itemsize)),
    )(q, k, v, w_o_c)
    return out


# ----------------------- parameter init (deterministic) -----------------------
def _trunc_normal(key, shape, in_features, out_features):
    std = math.sqrt(2.0 / (in_features + out_features))
    return std * jax.random.truncated_normal(key, -3.0, 3.0, shape, jnp.float32)


# --------------------------- pure-JAX reference -------------------------------
def _reference(x, w_qkv, w_o, num_heads):
    B, S, D = x.shape
    d_k = D // num_heads
    qkv = jnp.einsum('od,bsd->bso', w_qkv, x)
    q, k, v = jnp.split(qkv, 3, axis=-1)

    def split_heads(t):
        return t.reshape(B, S, num_heads, d_k).transpose(0, 2, 1, 3)

    q, k, v = split_heads(q), split_heads(k), split_heads(v)
    scores = jnp.einsum('bhqd,bhkd->bhqk', q, k) / math.sqrt(d_k)
    mask = jnp.tril(jnp.ones((S, S), dtype=bool))
    scores = jnp.where(mask, scores, -jnp.inf)
    m = jnp.max(scores, axis=-1, keepdims=True)
    p = jnp.exp(scores - m)
    p = p / jnp.sum(p, axis=-1, keepdims=True)
    y = jnp.einsum('bhqk,bhkd->bhqd', p, v)
    y = y.transpose(0, 2, 1, 3).reshape(B, S, D)
    return jnp.einsum('od,bsd->bso', w_o, y)


if __name__ == "__main__":
    # ---- small shape (single tile): tight f32 check + bf16 path -------------
    B, S, D, H = 2, 8, 32, 4
    key = jax.random.PRNGKey(0)
    kx, kqkv, ko = jax.random.split(key, 3)

    x = jax.random.normal(kx, (B, S, D), dtype=jnp.float32)
    w_qkv = _trunc_normal(kqkv, (3 * D, D), in_features=D, out_features=3 * D)
    w_o = _trunc_normal(ko, (D, D), in_features=D, out_features=D)

    ref = _reference(x, w_qkv, w_o, H)

    out = jax.block_until_ready(multi_head_self_attention(x, w_qkv, w_o, H))
    assert out.shape == (B, S, D) and out.dtype == x.dtype
    assert jnp.allclose(out, ref, atol=1e-4, rtol=1e-4)

    out_bf16 = jax.block_until_ready(
        multi_head_self_attention(x, w_qkv, w_o, H, compute_dtype=jnp.bfloat16))
    assert out_bf16.shape == (B, S, D)
    assert jnp.allclose(out_bf16, ref, atol=1e-1, rtol=1e-1)

    # ---- multi-tile shape: exercises causal skip, clamped K/V DMA indices,
    # ---- masked/unmasked kv-block paths and the multi-block online softmax.
    B2, S2, D2, H2 = 1, 256, 64, 4
    kx2, kqkv2, ko2 = jax.random.split(jax.random.PRNGKey(1), 3)
    x2 = jax.random.normal(kx2, (B2, S2, D2), dtype=jnp.float32)
    w_qkv2 = _trunc_normal(kqkv2, (3 * D2, D2), in_features=D2, out_features=3 * D2)
    w_o2 = _trunc_normal(ko2, (D2, D2), in_features=D2, out_features=D2)

    ref2 = _reference(x2, w_qkv2, w_o2, H2)
    out2 = jax.block_until_ready(
        multi_head_self_attention(x2, w_qkv2, w_o2, H2, q_tile=64, kv_tile=128))
    assert out2.shape == (B2, S2, D2) and out2.dtype == x2.dtype
    assert jnp.allclose(out2, ref2, atol=1e-3, rtol=1e-3)

    print("KERNEL_OK")
</pallas_src>

<mosaic_0001>
module attributes {stable_mosaic.version = 11 : i64} {
  func.func @_qkv_proj_kernel(%arg0: i32, %arg1: i32, %arg2: memref<1x8x32xf32, #tpu.memory_space<vmem>>, %arg3: memref<96x32xf32, #tpu.memory_space<vmem>>, %arg4: memref<1x4x8x8xf32, #tpu.memory_space<vmem>>, %arg5: memref<1x4x8x8xf32, #tpu.memory_space<vmem>>, %arg6: memref<1x4x8x8xf32, #tpu.memory_space<vmem>>) attributes {dimension_semantics = [#tpu.dimension_semantics<parallel>, #tpu.dimension_semantics<parallel>], iteration_bounds = array<i64: 2, 1>, scalar_prefetch = 0 : i64, scratch_operands = 0 : i64, tpu.core_type = #tpu.core_type<tc>, window_params = [{transform_indices = @transform_0, window_bounds = array<i64: 1, 8, 32>}, {pipeline_mode = #tpu.pipeline_mode<synchronous>, transform_indices = @transform_1, window_bounds = array<i64: 96, 32>}, {transform_indices = @transform_2, window_bounds = array<i64: 1, 4, 8, 8>}, {transform_indices = @transform_3, window_bounds = array<i64: 1, 4, 8, 8>}, {transform_indices = @transform_4, window_bounds = array<i64: 1, 4, 8, 8>}]} {
    %c0 = arith.constant 0 : index
    %c0_0 = arith.constant 0 : index
    %c0_1 = arith.constant 0 : index
    %0 = vector.load %arg2[%c0, %c0_0, %c0_1] : memref<1x8x32xf32, #tpu.memory_space<vmem>>, vector<1x8x32xf32>
    %1 = vector.shape_cast %0 : vector<1x8x32xf32> to vector<8x32xf32>
    %c0_2 = arith.constant 0 : index
    %c0_3 = arith.constant 0 : index
    %2 = vector.load %arg3[%c0_2, %c0_3] : memref<96x32xf32, #tpu.memory_space<vmem>>, vector<96x32xf32>
    %cst = arith.constant dense<0.000000e+00> : vector<8x96xf32>
    %3 = tpu.matmul %1, %2, %cst {dimension_numbers = #tpu.dot_dimension_numbers<[1], [1], [0], [0], [0, 0, 1, 0], [], []>} : vector<8x32xf32>, vector<96x32xf32>, vector<8x96xf32> -> vector<8x96xf32>
    %4 = vector.extract_strided_slice %3 {offsets = [0, 0], sizes = [8, 8], strides = [1, 1]} : vector<8x96xf32> to vector<8x8xf32>
    %c0_4 = arith.constant 0 : index
    %c0_5 = arith.constant 0 : index
    %c0_6 = arith.constant 0 : index
    %c0_7 = arith.constant 0 : index
    %5 = vector.load %arg4[%c0_4, %c0_5, %c0_6, %c0_7] : memref<1x4x8x8xf32, #tpu.memory_space<vmem>>, vector<1x1x8x8xf32>
    %6 = vector.shape_cast %5 : vector<1x1x8x8xf32> to vector<8x8xf32>
    %7 = vector.shape_cast %4 : vector<8x8xf32> to vector<1x1x8x8xf32>
    tpu.vector_store %arg4[%c0_4, %c0_5, %c0_6, %c0_7], %7 {strides = array<i32>} : memref<1x4x8x8xf32, #tpu.memory_space<vmem>>, vector<1x1x8x8xf32>,
    %8 = vector.extract_strided_slice %3 {offsets = [0, 32], sizes = [8, 8], strides = [1, 1]} : vector<8x96xf32> to vector<8x8xf32>
    %c0_8 = arith.constant 0 : index
    %c0_9 = arith.constant 0 : index
    %c0_10 = arith.constant 0 : index
    %c0_11 = arith.constant 0 : index
    %9 = vector.load %arg5[%c0_8, %c0_9, %c0_10, %c0_11] : memref<1x4x8x8xf32, #tpu.memory_space<vmem>>, vector<1x1x8x8xf32>
    %10 = vector.shape_cast %9 : vector<1x1x8x8xf32> to vector<8x8xf32>
    %11 = vector.shape_cast %8 : vector<8x8xf32> to vector<1x1x8x8xf32>
    tpu.vector_store %arg5[%c0_8, %c0_9, %c0_10, %c0_11], %11 {strides = array<i32>} : memref<1x4x8x8xf32, #tpu.memory_space<vmem>>, vector<1x1x8x8xf32>,
    %12 = vector.extract_strided_slice %3 {offsets = [0, 64], sizes = [8, 8], strides = [1, 1]} : vector<8x96xf32> to vector<8x8xf32>
    %c0_12 = arith.constant 0 : index
    %c0_13 = arith.constant 0 : index
    %c0_14 = arith.constant 0 : index
    %c0_15 = arith.constant 0 : index
    %13 = vector.load %arg6[%c0_12, %c0_13, %c0_14, %c0_15] : memref<1x4x8x8xf32, #tpu.memory_space<vmem>>, vector<1x1x8x8xf32>
    %14 = vector.shape_cast %13 : vector<1x1x8x8xf32> to vector<8x8xf32>
    %15 = vector.shape_cast %12 : vector<8x8xf32> to vector<1x1x8x8xf32>
    tpu.vector_store %arg6[%c0_12, %c0_13, %c0_14, %c0_15], %15 {strides = array<i32>} : memref<1x4x8x8xf32, #tpu.memory_space<vmem>>, vector<1x1x8x8xf32>,
    %16 = vector.extract_strided_slice %3 {offsets = [0, 8], sizes = [8, 8], strides = [1, 1]} : vector<8x96xf32> to vector<8x8xf32>
    %c0_16 = arith.constant 0 : index
    %c1 = arith.constant 1 : index
    %c0_17 = arith.constant 0 : index
    %c0_18 = arith.constant 0 : index
    %17 = vector.load %arg4[%c0_16, %c1, %c0_17, %c0_18] : memref<1x4x8x8xf32, #tpu.memory_space<vmem>>, vector<1x1x8x8xf32>
    %18 = vector.shape_cast %17 : vector<1x1x8x8xf32> to vector<8x8xf32>
    %19 = vector.shape_cast %16 : vector<8x8xf32> to vector<1x1x8x8xf32>
    tpu.vector_store %arg4[%c0_16, %c1, %c0_17, %c0_18], %19 {strides = array<i32>} : memref<1x4x8x8xf32, #tpu.memory_space<vmem>>, vector<1x1x8x8xf32>,
    %20 = vector.extract_strided_slice %3 {offsets = [0, 40], sizes = [8, 8], strides = [1, 1]} : vector<8x96xf32> to vector<8x8xf32>
    %c0_19 = arith.constant 0 : index
    %c1_20 = arith.constant 1 : index
    %c0_21 = arith.constant 0 : index
    %c0_22 = arith.constant 0 : index
    %21 = vector.load %arg5[%c0_19, %c1_20, %c0_21, %c0_22] : memref<1x4x8x8xf32, #tpu.memory_space<vmem>>, vector<1x1x8x8xf32>
    %22 = vector.shape_cast %21 : vector<1x1x8x8xf32> to vector<8x8xf32>
    %23 = vector.shape_cast %20 : vector<8x8xf32> to vector<1x1x8x8xf32>
    tpu.vector_store %arg5[%c0_19, %c1_20, %c0_21, %c0_22], %23 {strides = array<i32>} : memref<1x4x8x8xf32, #tpu.memory_space<vmem>>, vector<1x1x8x8xf32>,
    %24 = vector.extract_strided_slice %3 {offsets = [0, 72], sizes = [8, 8], strides = [1, 1]} : vector<8x96xf32> to vector<8x8xf32>
    %c0_23 = arith.constant 0 : index
    %c1_24 = arith.constant 1 : index
    %c0_25 = arith.constant 0 : index
    %c0_26 = arith.constant 0 : index
    %25 = vector.load %arg6[%c0_23, %c1_24, %c0_25, %c0_26] : memref<1x4x8x8xf32, #tpu.memory_space<vmem>>, vector<1x1x8x8xf32>
    %26 = vector.shape_cast %25 : vector<1x1x8x8xf32> to vector<8x8xf32>
    %27 = vector.shape_cast %24 : vector<8x8xf32> to vector<1x1x8x8xf32>
    tpu.vector_store %arg6[%c0_23, %c1_24, %c0_25, %c0_26], %27 {strides = array<i32>} : memref<1x4x8x8xf32, #tpu.memory_space<vmem>>, vector<1x1x8x8xf32>,
    %28 = vector.extract_strided_slice %3 {offsets = [0, 16], sizes = [8, 8], strides = [1, 1]} : vector<8x96xf32> to vector<8x8xf32>
    %c0_27 = arith.constant 0 : index
    %c2 = arith.constant 2 : index
    %c0_28 = arith.constant 0 : index
    %c0_29 = arith.constant 0 : index
    %29 = vector.load %arg4[%c0_27, %c2, %c0_28, %c0_29] : memref<1x4x8x8xf32, #tpu.memory_space<vmem>>, vector<1x1x8x8xf32>
    %30 = vector.shape_cast %29 : vector<1x1x8x8xf32> to vector<8x8xf32>
    %31 = vector.shape_cast %28 : vector<8x8xf32> to vector<1x1x8x8xf32>
    tpu.vector_store %arg4[%c0_27, %c2, %c0_28, %c0_29], %31 {strides = array<i32>} : memref<1x4x8x8xf32, #tpu.memory_space<vmem>>, vector<1x1x8x8xf32>,
    %32 = vector.extract_strided_slice %3 {offsets = [0, 48], sizes = [8, 8], strides = [1, 1]} : vector<8x96xf32> to vector<8x8xf32>
    %c0_30 = arith.constant 0 : index
    %c2_31 = arith.constant 2 : index
    %c0_32 = arith.constant 0 : index
    %c0_33 = arith.constant 0 : index
    %33 = vector.load %arg5[%c0_30, %c2_31, %c0_32, %c0_33] : memref<1x4x8x8xf32, #tpu.memory_space<vmem>>, vector<1x1x8x8xf32>
    %34 = vector.shape_cast %33 : vector<1x1x8x8xf32> to vector<8x8xf32>
    %35 = vector.shape_cast %32 : vector<8x8xf32> to vector<1x1x8x8xf32>
    tpu.vector_store %arg5[%c0_30, %c2_31, %c0_32, %c0_33], %35 {strides = array<i32>} : memref<1x4x8x8xf32, #tpu.memory_space<vmem>>, vector<1x1x8x8xf32>,
    %36 = vector.extract_strided_slice %3 {offsets = [0, 80], sizes = [8, 8], strides = [1, 1]} : vector<8x96xf32> to vector<8x8xf32>
    %c0_34 = arith.constant 0 : index
    %c2_35 = arith.constant 2 : index
    %c0_36 = arith.constant 0 : index
    %c0_37 = arith.constant 0 : index
    %37 = vector.load %arg6[%c0_34, %c2_35, %c0_36, %c0_37] : memref<1x4x8x8xf32, #tpu.memory_space<vmem>>, vector<1x1x8x8xf32>
    %38 = vector.shape_cast %37 : vector<1x1x8x8xf32> to vector<8x8xf32>
    %39 = vector.shape_cast %36 : vector<8x8xf32> to vector<1x1x8x8xf32>
    tpu.vector_store %arg6[%c0_34, %c2_35, %c0_36, %c0_37], %39 {strides = array<i32>} : memref<1x4x8x8xf32, #tpu.memory_space<vmem>>, vector<1x1x8x8xf32>,
    %40 = vector.extract_strided_slice %3 {offsets = [0, 24], sizes = [8, 8], strides = [1, 1]} : vector<8x96xf32> to vector<8x8xf32>
    %c0_38 = arith.constant 0 : index
    %c3 = arith.constant 3 : index
    %c0_39 = arith.constant 0 : index
    %c0_40 = arith.constant 0 : index
    %41 = vector.load %arg4[%c0_38, %c3, %c0_39, %c0_40] : memref<1x4x8x8xf32, #tpu.memory_space<vmem>>, vector<1x1x8x8xf32>
    %42 = vector.shape_cast %41 : vector<1x1x8x8xf32> to vector<8x8xf32>
    %43 = vector.shape_cast %40 : vector<8x8xf32> to vector<1x1x8x8xf32>
    tpu.vector_store %arg4[%c0_38, %c3, %c0_39, %c0_40], %43 {strides = array<i32>} : memref<1x4x8x8xf32, #tpu.memory_space<vmem>>, vector<1x1x8x8xf32>,
    %44 = vector.extract_strided_slice %3 {offsets = [0, 56], sizes = [8, 8], strides = [1, 1]} : vector<8x96xf32> to vector<8x8xf32>
    %c0_41 = arith.constant 0 : index
    %c3_42 = arith.constant 3 : index
    %c0_43 = arith.constant 0 : index
    %c0_44 = arith.constant 0 : index
    %45 = vector.load %arg5[%c0_41, %c3_42, %c0_43, %c0_44] : memref<1x4x8x8xf32, #tpu.memory_space<vmem>>, vector<1x1x8x8xf32>
    %46 = vector.shape_cast %45 : vector<1x1x8x8xf32> to vector<8x8xf32>
    %47 = vector.shape_cast %44 : vector<8x8xf32> to vector<1x1x8x8xf32>
    tpu.vector_store %arg5[%c0_41, %c3_42, %c0_43, %c0_44], %47 {strides = array<i32>} : memref<1x4x8x8xf32, #tpu.memory_space<vmem>>, vector<1x1x8x8xf32>,
    %48 = vector.extract_strided_slice %3 {offsets = [0, 88], sizes = [8, 8], strides = [1, 1]} : vector<8x96xf32> to vector<8x8xf32>
    %c0_45 = arith.constant 0 : index
    %c3_46 = arith.constant 3 : index
    %c0_47 = arith.constant 0 : index
    %c0_48 = arith.constant 0 : index
    %49 = vector.load %arg6[%c0_45, %c3_46, %c0_47, %c0_48] : memref<1x4x8x8xf32, #tpu.memory_space<vmem>>, vector<1x1x8x8xf32>
    %50 = vector.shape_cast %49 : vector<1x1x8x8xf32> to vector<8x8xf32>
    %51 = vector.shape_cast %48 : vector<8x8xf32> to vector<1x1x8x8xf32>
    tpu.vector_store %arg6[%c0_45, %c3_46, %c0_47, %c0_48], %51 {strides = array<i32>} : memref<1x4x8x8xf32, #tpu.memory_space<vmem>>, vector<1x1x8x8xf32>,
    return
  }
  func.func @transform_0(%arg0: i32, %arg1: i32) -> (i32, i32, i32) {
    %c0_i32 = arith.constant 0 : i32
    %c0_i32_0 = arith.constant 0 : i32
    return %arg0, %arg1, %c0_i32 : i32, i32, i32
  }
  func.func @transform_1(%arg0: i32, %arg1: i32) -> (i32, i32) {
    %c0_i32 = arith.constant 0 : i32
    %c0_i32_0 = arith.constant 0 : i32
    %c0_i32_1 = arith.constant 0 : i32
    return %c0_i32, %c0_i32_0 : i32, i32
  }
  func.func @transform_2(%arg0: i32, %arg1: i32) -> (i32, i32, i32, i32) {
    %c0_i32 = arith.constant 0 : i32
    %c0_i32_0 = arith.constant 0 : i32
    %c0_i32_1 = arith.constant 0 : i32
    return %arg0, %c0_i32, %arg1, %c0_i32_0 : i32, i32, i32, i32
  }
  func.func @transform_3(%arg0: i32, %arg1: i32) -> (i32, i32, i32, i32) {
    %c0_i32 = arith.constant 0 : i32
    %c0_i32_0 = arith.constant 0 : i32
    %c0_i32_1 = arith.constant 0 : i32
    return %arg0, %c0_i32, %arg1, %c0_i32_0 : i32, i32, i32, i32
  }
  func.func @transform_4(%arg0: i32, %arg1: i32) -> (i32, i32, i32, i32) {
    %c0_i32 = arith.constant 0 : i32
    %c0_i32_0 = arith.constant 0 : i32
    %c0_i32_1 = arith.constant 0 : i32
    return %arg0, %c0_i32, %arg1, %c0_i32_0 : i32, i32, i32, i32
  }
}

</mosaic_0001>

<llo_original>
// kernel: tpu_custom_call.1
$region0: #{tpu_custom_call.1}
  #allocation0 [shape = 'u32[]', space=smem, size = 0x4, offset = 0x4, fixed_abs, tag = 'smem constant byte address 0x4 - core index']
  #allocation1 [shape = 'u32[144,128]{1,0:T(1,128)}', space=vmem, size = 0x12000, scoped, tag = 'internal scratch']
  %s0 = inlined_call_operand.vmem [shape: f32[2,8,32], index: 0, kind: input, shape index: {}]
  %s1 = inlined_call_operand.vmem [shape: f32[96,32], index: 1, kind: input, shape index: {}]
  %s2 = inlined_call_operand.hbm [shape: f32[2,4,8,8], index: 2, kind: output, shape index: {0}]
  %s3 = inlined_call_operand.hbm [shape: f32[2,4,8,8], index: 3, kind: output, shape index: {1}]
  %s4 = inlined_call_operand.hbm [shape: f32[2,4,8,8], index: 4, kind: output, shape index: {2}]
  %5 = xla_tuple %s2, %s3, %s4
  %s6 = sld [smem:[#allocation0]]
  $region57: #{tpu_custom_call.1} parent=0
    _
  %s8 = ssub.s32 1, %s6
  %s9 = scalar_select 0, %s8, %s6
  $region1: #{tpu_custom_call.1} parent=0
    #allocation2 [shape = 'u8[32768]{0}', space=vmem, size = 0x8000, scoped, tag = 'output window, operand 0']
    #allocation3 [shape = 's32[2]{0}', space=sflag, size = 0x8, scoped, tag = 'scoped memory for tpu_custom_call.1']
    #allocation4 [shape = 'u8[32768]{0}', space=vmem, size = 0x8000, scoped, tag = 'output window, operand 1']
    #allocation5 [shape = 's32[2]{0}', space=sflag, size = 0x8, scoped, tag = 'scoped memory for tpu_custom_call.1']
    #allocation6 [shape = 'u8[32768]{0}', space=vmem, size = 0x8000, scoped, tag = 'output window, operand 2']
    %10 = vsyncpa [#allocation3], 0
    %s11 = scalar_lea.sflag [#allocation3], 1
    %12 = vsyncpa %s11, 0
    %13 = vsyncpa [#allocation5], 0
    %s14 = scalar_lea.sflag [#allocation5], 1
    %15 = vsyncpa %s14, 0
    loop: start=0, step=1, limit=4
    $region2: #{tpu_custom_call.1} parent=1 // loop_pre_header
      _
    $region3: #{tpu_custom_call.1} parent=1 // loop_header
      %s17 = sphi 0, %s21
      %p18 = scmp.ge.s32.totalorder %s17, 4
      %s24 = sphi 0, %s36
      %s25 = sphi 0, %s32
      %s26 = sphi 0, %s24
      %s27 = sphi 0, %s25
      %s28 = sphi 0, %s26
      %s29 = sphi 0, %s27
      %s41 = sphi 0, %s43
      %s44 = sphi 0, %s41
      %s45 = sphi 0, %s44
      %s61 = sphi 0, %s45
      %s65 = sphi 0, %s65
      %s67 = sphi 0, %s65
      %s68 = sphi 0, %s67
      %s82 = sphi 0, %s68
      %s90 = sphi 0, %s92
      %s93 = sphi 0, %s90
      %s94 = sphi 0, %s93
      %s110 = sphi 0, %s94
      %s118 = sphi 0, %s120
      %s121 = sphi 0, %s118
      %s122 = sphi 0, %s121
      %s138 = sphi 0, %s122
      %s146 = sphi 0, %s148
      %s149 = sphi 0, %s146
      %s150 = sphi 0, %s149
      %s166 = sphi 0, %s150
    $region4: #{tpu_custom_call.1} parent=1 // loop_header_branch
      %20 = sbr.rel (%p18) target = $region8
    $region5: #{tpu_custom_call.1} parent=1 // loop_body
      %s22 = ssub.s32 %s17, 1
      %s23 = ssub.s32 %s17, 2
      %s30 = sadd.s32 1, %s25
      %p31 = scmp.ge.s32.totalorder %s30, 1
      %s32 = scalar_select %p31, 0, %s30
      %s33 = sadd.s32 1, %s24
      %s34 = scalar_select %p31, %s33, %s24
      %p35 = scmp.ge.s32.totalorder %s34, 2
      %s36 = scalar_select %p35, 0, %s34
      %s37 = ssub.s32 %s24, %s36
      %s38 = ssub.s32 %s25, %s32
      %s39 = sor.u32 %s37, %s38
      %p40 = scmp.eq.s32.totalorder %s39, 0
      %s42 = sadd.s32 %s41, 1
      %s43 = scalar_select %p40, %s41, %s42
      %p46 = pneg %p40
      %p47 = scmp.eq.s32.totalorder %s17, 1
      %p48 = por %p46, %p47
      %p49 = scmp.ne.s32.totalorder %s41, %s44
      %p50 = scmp.eq.s32.totalorder %s17, 0
      %p51 = por %p49, %p50
      %p52 = scmp.ne.s32.totalorder %s41, %s44
      %p53 = scmp.eq.s32.totalorder %s22, 1
      %p54 = por %p52, %p53
      %p55 = scmp.ne.s32.totalorder %s44, %s45
      %p56 = scmp.eq.s32.totalorder %s22, 0
      %p57 = por %p55, %p56
      %p58 = scmp.ne.s32.totalorder %s44, %s45
      %p59 = scmp.eq.s32.totalorder %s23, 1
      %p60 = por %p58, %p59
      %p62 = scmp.ne.s32.totalorder %s45, %s61
      %p63 = scmp.eq.s32.totalorder %s23, 0
      %p64 = por %p62, %p63
      %s66 = sadd.s32 %s65, 1
      %p69 = scmp.eq.s32.totalorder %s17, 1
      %p70 = scmp.ne.s32.totalorder %s65, %s67
      %p71 = scmp.eq.s32.totalorder %s17, 0
      %p72 = por %p70, %p71
      %p73 = scmp.ne.s32.totalorder %s65, %s67
      %p74 = scmp.eq.s32.totalorder %s22, 1
      %p75 = por %p73, %p74
      %p76 = scmp.ne.s32.totalorder %s67, %s68
      %p77 = scmp.eq.s32.totalorder %s22, 0
      %p78 = por %p76, %p77
      %p79 = scmp.ne.s32.totalorder %s67, %s68
      %p80 = scmp.eq.s32.totalorder %s23, 1
      %p81 = por %p79, %p80
      %p83 = scmp.ne.s32.totalorder %s68, %s82
      %p84 = scmp.eq.s32.totalorder %s23, 0
      %p85 = por %p83, %p84
      %s86 = ssub.s32 %s24, %s36
      %s87 = ssub.s32 %s25, %s32
      %s88 = sor.u32 %s86, %s87
      %p89 = scmp.eq.s32.totalorder %s88, 0
      %s91 = sadd.s32 %s90, 1
      %s92 = scalar_select %p89, %s90, %s91
      %p95 = pneg %p89
      %p96 = scmp.eq.s32.totalorder %s17, 1
      %p97 = por %p95, %p96
      %p98 = scmp.ne.s32.totalorder %s90, %s93
      %p99 = scmp.eq.s32.totalorder %s17, 0
      %p100 = por %p98, %p99
      %p101 = scmp.ne.s32.totalorder %s90, %s93
      %p102 = scmp.eq.s32.totalorder %s22, 1
      %p103 = por %p101, %p102
      %p104 = scmp.ne.s32.totalorder %s93, %s94
      %p105 = scmp.eq.s32.totalorder %s22, 0
      %p106 = por %p104, %p105
      %p107 = scmp.ne.s32.totalorder %s93, %s94
      %p108 = scmp.eq.s32.totalorder %s23, 1
      %p109 = por %p107, %p108
      %p111 = scmp.ne.s32.totalorder %s94, %s110
      %p112 = scmp.eq.s32.totalorder %s23, 0
      %p113 = por %p111, %p112
      %s114 = ssub.s32 %s24, %s36
      %s115 = ssub.s32 %s25, %s32
      %s116 = sor.u32 %s114, %s115
      %p117 = scmp.eq.s32.totalorder %s116, 0
      %s119 = sadd.s32 %s118, 1
      %s120 = scalar_select %p117, %s118, %s119
      %p123 = pneg %p117
      %p124 = scmp.eq.s32.totalorder %s17, 1
      %p125 = por %p123, %p124
      %p126 = scmp.ne.s32.totalorder %s118, %s121
      %p127 = scmp.eq.s32.totalorder %s17, 0
      %p128 = por %p126, %p127
      %p129 = scmp.ne.s32.totalorder %s118, %s121
      %p130 = scmp.eq.s32.totalorder %s22, 1
      %p131 = por %p129, %p130
      %p132 = scmp.ne.s32.totalorder %s121, %s122
      %p133 = scmp.eq.s32.totalorder %s22, 0
      %p134 = por %p132, %p133
      %p135 = scmp.ne.s32.totalorder %s121, %s122
      %p136 = scmp.eq.s32.totalorder %s23, 1
      %p137 = por %p135, %p136
      %p139 = scmp.ne.s32.totalorder %s122, %s138
      %p140 = scmp.eq.s32.totalorder %s23, 0
      %p141 = por %p139, %p140
      %s142 = ssub.s32 %s24, %s36
      %s143 = ssub.s32 %s25, %s32
      %s144 = sor.u32 %s142, %s143
      %p145 = scmp.eq.s32.totalorder %s144, 0
      %s147 = sadd.s32 %s146, 1
      %s148 = scalar_select %p145, %s146, %s147
      %p151 = pneg %p145
      %p152 = scmp.eq.s32.totalorder %s17, 1
      %p153 = por %p151, %p152
      %p154 = scmp.ne.s32.totalorder %s146, %s149
      %p155 = scmp.eq.s32.totalorder %s17, 0
      %p156 = por %p154, %p155
      %p157 = scmp.ne.s32.totalorder %s146, %s149
      %p158 = scmp.eq.s32.totalorder %s22, 1
      %p159 = por %p157, %p158
      %p160 = scmp.ne.s32.totalorder %s149, %s150
      %p161 = scmp.eq.s32.totalorder %s22, 0
      %p162 = por %p160, %p161
      %p163 = scmp.ne.s32.totalorder %s149, %s150
      %p164 = scmp.eq.s32.totalorder %s23, 1
      %p165 = por %p163, %p164
      %p167 = scmp.ne.s32.totalorder %s150, %s166
      %p168 = scmp.eq.s32.totalorder %s23, 0
      %p169 = por %p167, %p168
      %p170 = scmp.le.s32.totalorder 1, %s17
      %p171 = scmp.lt.s32.totalorder %s17, 3
      %p172 = pnand %p170, %p171
      %p173 = pneg %p172
      // Predicated region
      $region9: #{tpu_custom_call.1} parent=5 // pred_check
        _
      $region10: #{tpu_custom_call.1} parent=5 // pred_check_branch
        %175 = sbr.rel (%p172) target = $region12
      $region11: #{tpu_custom_call.1} parent=5 // pred_region
        %s176 = ssub.s32 %s17, 1
        // Predicated region
        $region13: #{tpu_custom_call.1} parent=11 // pred_check
          %p177 = pneg %p78
        $region14: #{tpu_custom_call.1} parent=11 // pred_check_branch
          %179 = sbr.rel (%p177) target = $region16
        $region15: #{tpu_custom_call.1} parent=11 // pred_region
          _
        $region16: #{tpu_custom_call.1} parent=11 // pred_fallthru
          _
      $region12: #{tpu_custom_call.1} parent=5 // pred_fallthru
        _
      %p180 = scmp.lt.s32.totalorder %s17, 2
      // Predicated region
      $region17: #{tpu_custom_call.1} parent=5 // pred_check
        %p181 = pneg %p180
      $region18: #{tpu_custom_call.1} parent=5 // pred_check_branch
        %183 = sbr.rel (%p181) target = $region20
      $region19: #{tpu_custom_call.1} parent=5 // pred_region
        // Predicated region
        $region21: #{tpu_custom_call.1} parent=19 // pred_check
          %p184 = pneg %p51
        $region22: #{tpu_custom_call.1} parent=19 // pred_check_branch
          %186 = sbr.rel (%p184) target = $region24
        $region23: #{tpu_custom_call.1} parent=19 // pred_region
          %p187 = scmp.lt.s32.totalorder %s24, 1
          %s188 = scalar_select %p187, %s24, 1
          %p189 = scmp.lt.s32.totalorder %s25, 0
          %s190 = scalar_select %p189, %s25, 0
          %s191 = sadd.s32 %s190, %s188
          %s192 = smul.addr %s191, 8
          %s193 = scalar_lea.vmem %s0, %s192
        $region24: #{tpu_custom_call.1} parent=19 // pred_fallthru
          _
      $region20: #{tpu_custom_call.1} parent=5 // pred_fallthru
        _
      %p194 = scmp.le.s32.totalorder 1, %s17
      %p195 = scmp.lt.s32.totalorder %s17, 3
      %p196 = pnand %p194, %p195
      %p197 = pneg %p196
      // Predicated region
      $region25: #{tpu_custom_call.1} parent=5 // pred_check
        _
      $region26: #{tpu_custom_call.1} parent=5 // pred_check_branch
        %199 = sbr.rel (%p196) target = $region28
      $region27: #{tpu_custom_call.1} parent=5 // pred_region
        %s200 = ssub.s32 %s17, 1
        %p201 = scmp.lt.s32.totalorder %s26, 1
        %s202 = scalar_select %p201, %s26, 1
        %p203 = scmp.lt.s32.totalorder %s27, 0
        %s204 = scalar_select %p203, %s27, 0
        %s205 = sadd.s32 %s204, %s202
        %s206 = smul.addr %s205, 8
        %s207 = scalar_lea.vmem %s0, %s206
        %p208 = pneg %p57
        %p209 = pneg %p54
        %p210 = pneg %p78
        %p211 = pneg %p75
        %p212 = pneg %p106
        %p213 = pneg %p103
        %s214 = sand.u32 %s93, 1
        %s215 = scalar_lea.sflag [#allocation3], %s214
        %s216 = sand.u32 %s93, 1
        %s217 = smul.addr %s216, 32
        %s218 = scalar_lea.vmem [#allocation2], %s217
        %p219 = pneg %p134
        %p220 = pneg %p131
        %s221 = sand.u32 %s22, 1
        %s222 = scalar_lea.sflag [#allocation5], %s221
        %s223 = sand.u32 %s121, 1
        %s224 = smul.addr %s223, 32
        %s225 = scalar_lea.vmem [#allocation4], %s224
        %p226 = pneg %p162
        %p227 = pneg %p159
        %s228 = sand.u32 %s22, 1
        %s229 = scalar_lea.sflag [#allocation5], %s228
        %s230 = sand.u32 %s149, 1
        %s231 = smul.addr %s230, 32
        %s232 = scalar_lea.vmem [#allocation6], %s231
        %p233 = scmp.lt.s32.totalorder %s26, 1
        %s234 = scalar_select %p233, %s26, 1
        %p235 = scmp.lt.s32.totalorder %s27, 0
        %s236 = scalar_select %p235, %s27, 0
        %s237 = sadd.s32 %s236, %s234
        %s238 = smul.addr %s237, 8
        %s239 = scalar_lea.vmem %s0, %s238
        %v240 = vld [vmem:[%s239] sm:$0xff]
        %v241 = vld [vmem:[%s1] sm:$0xff]
        %v242 = vld [vmem:[%s1 + $0x8] sm:$0xff]
        %v243 = vld [vmem:[%s1 + $0x10] sm:$0xff]
        %v244 = vld [vmem:[%s1 + $0x18] sm:$0xff]
        %v245 = vld [vmem:[%s1 + $0x20] sm:$0xff]
        %v246 = vld [vmem:[%s1 + $0x28] sm:$0xff]
        %v247 = vld [vmem:[%s1 + $0x30] sm:$0xff]
        %v248 = vld [vmem:[%s1 + $0x38] sm:$0xff]
        %v249 = vld [vmem:[%s1 + $0x40] sm:$0xff]
        %v250 = vld [vmem:[%s1 + $0x48] sm:$0xff]
        %v251 = vld [vmem:[%s1 + $0x50] sm:$0xff]
        %v252 = vld [vmem:[%s1 + $0x58] sm:$0xff]
        %vm253 = vcmask 261120
        %v255 = vsel %vm253, %v240, 0
        %v258 = vsel %vm253, %v241, 0
        %v261 = vsel %vm253, %v242, 0
        %v264 = vsel %vm253, %v243, 0
        %v267 = vsel %vm253, %v244, 0
        %v270 = vsel %vm253, %v245, 0
        %v273 = vsel %vm253, %v246, 0
        %v276 = vsel %vm253, %v247, 0
        %v279 = vsel %vm253, %v248, 0
        %v282 = vsel %vm253, %v249, 0
        %v285 = vsel %vm253, %v250, 0
        %v288 = vsel %vm253, %v251, 0
        %v291 = vsel %vm253, %v252, 0
        %293 = vmatprep.subr.mxu0 0.0
        %294 = vmatpush1.xpose.msra.mxu0 %v258
        %295 = vmatprep.subr.mxu0 0.0
        %296 = vmatpush1.xpose.msra.mxu0 %v261
        %297 = vmatprep.subr.mxu0 0.0
        %298 = vmatpush1.xpose.msra.mxu0 %v264
        %299 = vmatprep.subr.mxu0 0.0
        %300 = vmatpush1.xpose.msra.mxu0 %v267
        %301 = vmatprep.subr.mxu0 0.0
        %302 = vmatpush1.xpose.msra.mxu0 %v270
        %303 = vmatprep.subr.mxu0 0.0
        %304 = vmatpush1.xpose.msra.mxu0 %v273
        %305 = vmatprep.subr.mxu0 0.0
        %306 = vmatpush1.xpose.msra.mxu0 %v276
        %307 = vmatprep.subr.mxu0 0.0
        %308 = vmatpush1.xpose.msra.mxu0 %v279
        %309 = vmatprep.subr.mxu0 0.0
        %310 = vmatpush1.xpose.msra.mxu0 %v282
        %311 = vmatprep.subr.mxu0 0.0
        %312 = vmatpush1.xpose.msra.mxu0 %v285
        %313 = vmatprep.subr.mxu0 0.0
        %314 = vmatpush1.xpose.msra.mxu0 %v288
        %315 = vmatprep.subr.mxu0 0.0
        %316 = vmatpush1.xpose.msra.mxu0 %v291
        %317 = vmatprep.subr.mxu0 0.0
        %318 = vmatpush1.xpose.msra.mxu0 0.0
        %319 = vmatprep.subr.mxu0 0.0
        %320 = vmatpush1.xpose.msra.mxu0 0.0
        %321 = vmatprep.subr.mxu0 0.0
        %322 = vmatpush1.xpose.msra.mxu0 0.0
        %323 = vmatprep.subr.mxu0 0.0
        %324 = vmatpush1.xpose.msra.mxu0 0.0
        %325 = vmatprep.subr.mxu0 0.0
        %326 = vmatpush1.xpose.msra.mxu0 0.0
        %327 = vmatprep.subr.mxu0 0.0
        %328 = vmatpush1.xpose.msra.mxu0 0.0
        %329 = vmatprep.subr.mxu0 0.0
        %330 = vmatpush1.xpose.msra.mxu0 0.0
        %331 = vmatprep.subr.mxu0 0.0
        %332 = vmatpush1.xpose.msra.mxu0 0.0
        %333 = vmatprep.subr.mxu0 0.0
        %334 = vmatpush1.xpose.msra.mxu0 0.0
        %335 = vmatprep.subr.mxu0 0.0
        %336 = vmatpush1.xpose.msra.mxu0 0.0
        %337 = vmatprep.subr.mxu0 0.0
        %338 = vmatpush1.xpose.msra.mxu0 0.0
        %339 = vmatprep.subr.mxu0 0.0
        %340 = vmatpush1.xpose.msra.mxu0 0.0
        %341 = vmatprep.subr.mxu0 0.0
        %342 = vmatpush1.xpose.msra.mxu0 0.0
        %343 = vmatprep.subr.mxu0 0.0
        %344 = vmatpush1.xpose.msra.mxu0 0.0
        %345 = vmatprep.subr.mxu0 0.0
        %346 = vmatpush1.xpose.msra.mxu0 0.0
        %347 = vmatprep.subr.mxu0 0.0
        %348 = vmatpush1.xpose.msra.mxu0 0.0
        %349 = vmatprep.subr.mxu0 0.0
        %350 = vmatpush1.xpose.msra.mxu0 0.0
        %351 = vmatprep.subr.mxu0 0.0
        %352 = vmatpush1.xpose.msra.mxu0 0.0
        %353 = vmatprep.subr.mxu0 0.0
        %354 = vmatpush1.xpose.msra.mxu0 0.0
        %355 = vmatprep.subr.mxu0 0.0
        %356 = vmatpush1.xpose.msra.mxu0 0.0
        %357 = vmatprep.mubr.f32.mxu0 0.0
        %358 = vmatmul.mubr.f32.gmra.mrb[0].mxu0 %v255
        %v359 = vpop.f32.mrb[0].mxu0
        %v360 = vadd.f32 0.0, %v359
        %v361 = vpop.f32.mrb[0].mxu0
        %362 = vdwg.mxu0
        %vm363 = vcmask 64512
        %364 = vst.msk [vmem:[%s218] sm:$0xff] %vm363, %v360
        %366 = vrot.lane.b32.xlu0 %v360, 96
        %v367 = vpop.permute.xlu0 %366
        %369 = vst.msk [vmem:[%s225] sm:$0xff] %vm363, %v367
        %370 = vrot.lane.b32.xlu0 %v360, 64
        %v371 = vpop.permute.xlu0 %370
        %373 = vst.msk [vmem:[%s232] sm:$0xff] %vm363, %v371
        %374 = vrot.lane.b32.xlu0 %v360, 120
        %v375 = vpop.permute.xlu0 %374
        %s377 = scalar_lea.vmem %s218, 8 [#allocation2]
        %378 = vst.msk [vmem:[%s377] sm:$0xff] %vm363, %v375
        %379 = vrot.lane.b32.xlu0 %v360, 88
        %v380 = vpop.permute.xlu0 %379
        %s382 = scalar_lea.vmem %s225, 8 [#allocation4]
        %383 = vst.msk [vmem:[%s382] sm:$0xff] %vm363, %v380
        %384 = vrot.lane.b32.xlu0 %v360, 56
        %v385 = vpop.permute.xlu0 %384
        %s387 = scalar_lea.vmem %s232, 8 [#allocation6]
        %388 = vst.msk [vmem:[%s387] sm:$0xff] %vm363, %v385
        %389 = vrot.lane.b32.xlu0 %v360, 112
        %v390 = vpop.permute.xlu0 %389
        %s392 = scalar_lea.vmem %s218, 16 [#allocation2]
        %393 = vst.msk [vmem:[%s392] sm:$0xff] %vm363, %v390
        %394 = vrot.lane.b32.xlu0 %v360, 80
        %v395 = vpop.permute.xlu0 %394
        %s397 = scalar_lea.vmem %s225, 16 [#allocation4]
        %398 = vst.msk [vmem:[%s397] sm:$0xff] %vm363, %v395
        %399 = vrot.lane.b32.xlu0 %v360, 48
        %v400 = vpop.permute.xlu0 %399
        %s402 = scalar_lea.vmem %s232, 16 [#allocation6]
        %403 = vst.msk [vmem:[%s402] sm:$0xff] %vm363, %v400
        %404 = vrot.lane.b32.xlu0 %v360, 104
        %v405 = vpop.permute.xlu0 %404
        %s407 = scalar_lea.vmem %s218, 24 [#allocation2]
        %408 = vst.msk [vmem:[%s407] sm:$0xff] %vm363, %v405
        %409 = vrot.lane.b32.xlu0 %v360, 72
        %v410 = vpop.permute.xlu0 %409
        %s412 = scalar_lea.vmem %s225, 24 [#allocation4]
        %413 = vst.msk [vmem:[%s412] sm:$0xff] %vm363, %v410
        %414 = vrot.lane.b32.xlu0 %v360, 40
        %v415 = vpop.permute.xlu0 %414
        %s417 = scalar_lea.vmem %s232, 24 [#allocation6]
        %418 = vst.msk [vmem:[%s417] sm:$0xff] %vm363, %v415
        %s419 = sand.u32 %s93, 1
        %s420 = scalar_lea.sflag [#allocation3], %s419
        %s421 = sand.u32 %s93, 1
        %s422 = smul.addr %s421, 32
        %s423 = scalar_lea.vmem [#allocation2], %s422
        %s424 = sand.u32 %s22, 1
        %s425 = scalar_lea.sflag [#allocation5], %s424
        %s426 = sand.u32 %s121, 1
        %s427 = smul.addr %s426, 32
        %s428 = scalar_lea.vmem [#allocation4], %s427
        %s429 = sand.u32 %s22, 1
        %s430 = scalar_lea.sflag [#allocation5], %s429
        %s431 = sand.u32 %s149, 1
        %s432 = smul.addr %s431, 32
        %s433 = scalar_lea.vmem [#allocation6], %s432
        // Predicated region
        $region29: #{tpu_custom_call.1} parent=27 // pred_check
          %p434 = pneg %p103
        $region30: #{tpu_custom_call.1} parent=27 // pred_check_branch
          %436 = sbr.rel (%p434) target = $region32
        $region31: #{tpu_custom_call.1} parent=27 // pred_region
          %s438 = ssub.s32 512, 512
          %439 = vsyncadd %s420, %s438
          %s440 = smul.addr %s26, 4
          %s441 = sadd.s32 %s27, %s440
          %s442 = smul.addr %s441, 128
          %s443 = scalar_lea.hbm %s2, %s442
          %s444 = sshll.u32 %s423, 4
          %s445 = int_to_ptr.vmem [resolvable:$true] %s444
          %450 = dma.vmem_to_hbm [thread:$0]  %s445, 512, %s443, %s420, 128, 128, 8
        $region32: #{tpu_custom_call.1} parent=27 // pred_fallthru
          _
        // Predicated region
        $region33: #{tpu_custom_call.1} parent=27 // pred_check
          %p451 = pneg %p131
        $region34: #{tpu_custom_call.1} parent=27 // pred_check_branch
          %453 = sbr.rel (%p451) target = $region36
        $region35: #{tpu_custom_call.1} parent=27 // pred_region
          %s455 = ssub.s32 512, 512
          %456 = vsyncadd %s425, %s455
          %s457 = smul.addr %s26, 4
          %s458 = sadd.s32 %s27, %s457
          %s459 = smul.addr %s458, 128
          %s460 = scalar_lea.hbm %s3, %s459
          %s461 = sshll.u32 %s428, 4
          %s462 = int_to_ptr.vmem [resolvable:$true] %s461
          %467 = dma.vmem_to_hbm [thread:$0]  %s462, 512, %s460, %s425, 128, 128, 8
        $region36: #{tpu_custom_call.1} parent=27 // pred_fallthru
          _
        // Predicated region
        $region37: #{tpu_custom_call.1} parent=27 // pred_check
          %p468 = pneg %p159
        $region38: #{tpu_custom_call.1} parent=27 // pred_check_branch
          %470 = sbr.rel (%p468) target = $region40
        $region39: #{tpu_custom_call.1} parent=27 // pred_region
          %s472 = ssub.s32 512, 512
          %473 = vsyncadd %s430, %s472
          %s474 = smul.addr %s26, 4
          %s475 = sadd.s32 %s27, %s474
          %s476 = smul.addr %s475, 128
          %s477 = scalar_lea.hbm %s4, %s476
          %s478 = sshll.u32 %s433, 4
          %s479 = int_to_ptr.vmem [resolvable:$true] %s478
          %484 = dma.vmem_to_hbm [thread:$0]  %s479, 512, %s477, %s430, 128, 128, 8
        $region40: #{tpu_custom_call.1} parent=27 // pred_fallthru
          _
      $region28: #{tpu_custom_call.1} parent=5 // pred_fallthru
        _
      %p485 = scmp.le.s32.totalorder 2, %s17
      // Predicated region
      $region41: #{tpu_custom_call.1} parent=5 // pred_check
        %p486 = pneg %p485
      $region42: #{tpu_custom_call.1} parent=5 // pred_check_branch
        %488 = sbr.rel (%p486) target = $region44
      $region43: #{tpu_custom_call.1} parent=5 // pred_region
        %s489 = ssub.s32 %s17, 2
        // Predicated region
        $region45: #{tpu_custom_call.1} parent=43 // pred_check
          %p490 = pneg %p109
        $region46: #{tpu_custom_call.1} parent=43 // pred_check_branch
          %492 = sbr.rel (%p490) target = $region48
        $region47: #{tpu_custom_call.1} parent=43 // pred_region
          %s493 = sand.u32 %s94, 1
          %s494 = scalar_lea.sflag [#allocation3], %s493
          %s495 = sand.u32 %s94, 1
          %s496 = smul.addr %s495, 32
          %s497 = scalar_lea.vmem [#allocation2], %s496
          %498 = dma.done %s494, 512
        $region48: #{tpu_custom_call.1} parent=43 // pred_fallthru
          _
        // Predicated region
        $region49: #{tpu_custom_call.1} parent=43 // pred_check
          %p499 = pneg %p137
        $region50: #{tpu_custom_call.1} parent=43 // pred_check_branch
          %501 = sbr.rel (%p499) target = $region52
        $region51: #{tpu_custom_call.1} parent=43 // pred_region
          %s502 = sand.u32 %s23, 1
          %s503 = scalar_lea.sflag [#allocation5], %s502
          %s504 = sand.u32 %s122, 1
          %s505 = smul.addr %s504, 32
          %s506 = scalar_lea.vmem [#allocation4], %s505
          %507 = dma.done %s503, 512
        $region52: #{tpu_custom_call.1} parent=43 // pred_fallthru
          _
        // Predicated region
        $region53: #{tpu_custom_call.1} parent=43 // pred_check
          %p508 = pneg %p165
        $region54: #{tpu_custom_call.1} parent=43 // pred_check_branch
          %510 = sbr.rel (%p508) target = $region56
        $region55: #{tpu_custom_call.1} parent=43 // pred_region
          %s511 = sand.u32 %s23, 1
          %s512 = scalar_lea.sflag [#allocation5], %s511
          %s513 = sand.u32 %s150, 1
          %s514 = smul.addr %s513, 32
          %s515 = scalar_lea.vmem [#allocation6], %s514
          %516 = dma.done %s512, 512
        $region56: #{tpu_custom_call.1} parent=43 // pred_fallthru
          _
      $region44: #{tpu_custom_call.1} parent=5 // pred_fallthru
        _
    $region6: #{tpu_custom_call.1} parent=1 // loop_footer
      %s21 = sadd.s32 1, %s17
    $region7: #{tpu_custom_call.1} parent=1 // loop_footer_branch
      %16 = sbr.rel target = $region3
    $region8: #{tpu_custom_call.1} parent=1 // loop_exit
      _
    %517 = vsyncpa [#allocation3], 1
    %s518 = scalar_lea.sflag [#allocation3], 1
    %519 = vsyncpa %s518, 1
    %520 = vsyncpa [#allocation5], 1
    %s521 = scalar_lea.sflag [#allocation5], 1
    %522 = vsyncpa %s521, 1

</llo_original>
